<compile_context>
chip_gen: v7x
topology: tpu7x:2x2x1
jax: 0.10.0
libtpu: 0.0.40
codegen_flags: <defaults>
</compile_context>

<pallas_src>
import jax
import jax.numpy as jnp
from jax.experimental import pallas as pl
from jax.experimental.pallas import tpu as pltpu

_LANE_CANDIDATES = (2048, 1024, 512, 256, 128)


def _swish_kernel_native(x_ref, o_ref):
    # Compute in the storage dtype (f32, or bf16 on bf16-native VPU/EUP chips).
    # jax.nn.sigmoid -> lax.logistic: saturating, runs on the EUP slot.
    x = x_ref[...]
    o_ref[...] = x * jax.nn.sigmoid(x)


def _swish_kernel_f32(x_ref, o_ref):
    # Upcast path: narrow dtypes on chips without bf16 VPU/EUP (v5e), fp16, etc.
    xf = x_ref[...].astype(jnp.float32)
    o_ref[...] = (xf * jax.nn.sigmoid(xf)).astype(o_ref.dtype)


def _device_kind() -> str:
    try:
        return jax.devices()[0].device_kind.lower()
    except Exception:
        return ""


def _is_v5e(kind: str) -> bool:
    return ("v5 lite" in kind) or ("v5e" in kind) or ("v5lite" in kind)


def _is_v7(kind: str) -> bool:
    return "v7" in kind


def _target_block_bytes(kind: str) -> int:
    if _is_v5e(kind):
        return 4 << 20   # 820 GB/s: 4+4 MiB step ~10 us -> per-step overhead ~3.5%
    if _is_v7(kind):
        return 8 << 20   # 3.2 TB/s: 8 MiB tiles keep fixed overhead ~6-7%; 2x(8+8)=32 MiB << 64 MiB VMEM
    if "v6" in kind:
        return 8 << 20   # 1.4 TB/s: ~3% overhead; VMEM is 128 MiB so plenty of room
    return 4 << 20       # unknown chip: conservative


def swish(x: jax.Array, *, donate: bool = False, min_pallas_bytes: int = 512 * 1024) -> jax.Array:
    """Elementwise swish for arbitrary input shape (matches torch sigmoid(x)*x)."""
    orig_shape = x.shape
    orig_dtype = x.dtype
    n = x.size
    itemsize = jnp.dtype(orig_dtype).itemsize

    # Small-input bypass: pallas_call launch + pipeline prologue dominates for tiny
    # tensors; plain XLA fusion is strictly faster there.
    if n == 0 or n * itemsize < min_pallas_bytes:
        return x * jax.nn.sigmoid(x)

    # Pick the widest lane count that divides n exactly -> zero padding, zero copies.
    lanes = None
    for c in _LANE_CANDIDATES:
        if n % c == 0:
            lanes = c
            break
    if lanes is None:
        # Unaligned sizes are rare for activations; a pad+kernel+slice path would
        # roughly 3x the HBM traffic of this purely HBM-bound op, so fused XLA wins.
        return x * jax.nn.sigmoid(x)

    kind = _device_kind()
    rows = n // lanes
    x2d = jnp.ravel(x).reshape(rows, lanes)

    # Tile sized to ~target bytes per buffer, rows rounded to a multiple of 8.
    target_elems = _target_block_bytes(kind) // itemsize
    tile_rows = max(8, (target_elems // lanes) // 8 * 8)
    tile_rows = min(rows, tile_rows)  # small inputs -> single full-array block
    nblocks = pl.cdiv(rows, tile_rows)

    if _is_v7(kind) and nblocks >= 2:
        # Explicitly shard row-blocks across the two TensorCores so both cores'
        # DMA engines issue; plain "parallel" dimension_semantics is a near no-op.
        bpc = pl.cdiv(nblocks, 2)
        grid = (2, bpc)
        dim_sem = (pltpu.CORE_PARALLEL, pltpu.ARBITRARY)

        def idx(c, i):
            # Clamp: when nblocks is odd, core 1's padded last step recomputes core
            # 1's previous block — core-local, idempotent rewrite, no cross-core race.
            return (jnp.minimum(c * bpc + i, nblocks - 1), 0)
    else:
        grid = (nblocks,)
        dim_sem = ("parallel",)

        def idx(i):
            return (i, 0)

    block_bytes = tile_rows * lanes * itemsize
    # 2 input buffers + 2 output buffers + compiler scratch headroom; keep well under
    # the smallest per-core physical VMEM (v7x: 64 MiB per TensorCore).
    vmem_limit = int(min(max(16 << 20, 4 * block_bytes + (8 << 20)), 48 << 20))

    native_ok = (orig_dtype == jnp.float32) or (
        orig_dtype == jnp.bfloat16 and not _is_v5e(kind))
    kernel = _swish_kernel_native if native_ok else _swish_kernel_f32

    out2d = pl.pallas_call(
        kernel,
        out_shape=jax.ShapeDtypeStruct((rows, lanes), orig_dtype),
        grid_spec=pltpu.PrefetchScalarGridSpec(
            num_scalar_prefetch=0,
            grid=grid,
            in_specs=[pl.BlockSpec((tile_rows, lanes), idx)],
            out_specs=pl.BlockSpec((tile_rows, lanes), idx),
        ),
        compiler_params=pltpu.CompilerParams(
            dimension_semantics=dim_sem,
            vmem_limit_bytes=vmem_limit,
        ),
        input_output_aliases=({0: 0} if donate else {}),
    )(x2d)

    return out2d.reshape(orig_shape)


if __name__ == "__main__":
    key = jax.random.PRNGKey(0)
    k1, k2 = jax.random.split(key)

    # NCHW-style activation input consistent with the module: (2, 4, 16, 16).
    x_small = jax.random.normal(k1, (2, 4, 16, 16), dtype=jnp.float32)
    y_small = swish(x_small)                         # default: small-input XLA bypass
    y_small_pallas = swish(x_small, min_pallas_bytes=0)  # force the Pallas path

    # Slightly larger bf16 activation to exercise the native-bf16 kernel path.
    x_bf16 = jax.random.normal(k2, (2, 8, 32, 128), dtype=jnp.bfloat16)
    y_bf16 = swish(x_bf16, min_pallas_bytes=0)

    jax.block_until_ready((y_small, y_small_pallas, y_bf16))

    # Sanity checks against plain-JAX references.
    ref_small = x_small * jax.nn.sigmoid(x_small)
    assert y_small.shape == x_small.shape and y_small.dtype == x_small.dtype
    assert y_small_pallas.shape == x_small.shape and y_small_pallas.dtype == x_small.dtype
    assert jnp.max(jnp.abs(y_small - ref_small)) < 1e-5
    assert jnp.max(jnp.abs(y_small_pallas - ref_small)) < 1e-5

    xf = x_bf16.astype(jnp.float32)
    ref_bf16 = (xf * jax.nn.sigmoid(xf)).astype(jnp.bfloat16)
    assert y_bf16.shape == x_bf16.shape and y_bf16.dtype == x_bf16.dtype
    assert jnp.max(jnp.abs(y_bf16.astype(jnp.float32) -
                           ref_bf16.astype(jnp.float32))) < 5e-2

    print("KERNEL_OK")
</pallas_src>

<mosaic_0001>
module attributes {stable_mosaic.version = 11 : i64} {
  func.func @_swish_kernel_native(%arg0: i32, %arg1: memref<1x2048xf32, #tpu.memory_space<vmem>>, %arg2: memref<1x2048xf32, #tpu.memory_space<vmem>>) attributes {dimension_semantics = [#tpu.dimension_semantics<parallel>], iteration_bounds = array<i64: 1>, scalar_prefetch = 0 : i64, scratch_operands = 0 : i64, tpu.core_type = #tpu.core_type<tc>, window_params = [{transform_indices = @transform_0, window_bounds = array<i64: 1, 2048>}, {transform_indices = @transform_1, window_bounds = array<i64: 1, 2048>}]} {
    %c0 = arith.constant 0 : index
    %c0_0 = arith.constant 0 : index
    %0 = vector.load %arg1[%c0, %c0_0] : memref<1x2048xf32, #tpu.memory_space<vmem>>, vector<1x2048xf32>
    %1 = arith.negf %0 : vector<1x2048xf32>
    %2 = math.exp %1 : vector<1x2048xf32>
    %cst = arith.constant 1.000000e+00 : f32
    %3 = vector.broadcast %cst : f32 to vector<1x2048xf32>
    %4 = arith.addf %3, %2 : vector<1x2048xf32>
    %5 = arith.divf %3, %4 : vector<1x2048xf32>
    %6 = arith.mulf %0, %5 : vector<1x2048xf32>
    %c0_1 = arith.constant 0 : index
    %c0_2 = arith.constant 0 : index
    %7 = vector.load %arg2[%c0_1, %c0_2] : memref<1x2048xf32, #tpu.memory_space<vmem>>, vector<1x2048xf32>
    tpu.vector_store %arg2[%c0_1, %c0_2], %6 {strides = array<i32>} : memref<1x2048xf32, #tpu.memory_space<vmem>>, vector<1x2048xf32>,
    return
  }
  func.func @transform_0(%arg0: i32) -> (i32, i32) {
    %c0_i32 = arith.constant 0 : i32
    %c0_i32_0 = arith.constant 0 : i32
    return %arg0, %c0_i32 : i32, i32
  }
  func.func @transform_1(%arg0: i32) -> (i32, i32) {
    %c0_i32 = arith.constant 0 : i32
    %c0_i32_0 = arith.constant 0 : i32
    return %arg0, %c0_i32 : i32, i32
  }
}

</mosaic_0001>

<llo_original>
// kernel: tpu_custom_call.1
$region0: #{tpu_custom_call.1}
  #allocation0 [shape = 'u32[]', space=smem, size = 0x4, offset = 0x4, fixed_abs, tag = 'smem constant byte address 0x4 - core index']
  #allocation1 [shape = 'u32[144,128]{1,0:T(1,128)}', space=vmem, size = 0x12000, scoped, tag = 'internal scratch']
  %s0 = inlined_call_operand.hbm [shape: f32[1,2048], index: 0, kind: input, shape index: {}]
  %s1 = inlined_call_operand.hbm [shape: f32[1,2048], index: 1, kind: output, shape index: {}]
  %s2 = sld [smem:[#allocation0]]
  $region18: #{tpu_custom_call.1} parent=0
    _
  %s4 = ssub.s32 1, %s2
  %s5 = scalar_select 0, %s4, %s2
  $region1: #{tpu_custom_call.1} parent=0
    #allocation2 [shape = 'u8[8192]{0}', space=vmem, size = 0x2000, scoped, tag = 'input window, operand 0, single buffered']
    #allocation3 [shape = 's32[1]{0}', space=sflag, size = 0x4, scoped, tag = 'scoped memory for tpu_custom_call.1']
    #allocation4 [shape = 's32[1]{0}', space=sflag, size = 0x4, scoped, tag = 'scoped memory for tpu_custom_call.1']
    #allocation5 [shape = 'u8[8192]{0}', space=vmem, size = 0x2000, scoped, tag = 'output window, operand 0, single buffered']
    %6 = vsyncpa [#allocation3], 0
    %7 = vsyncpa [#allocation4], 0
    // Predicated region
    $region2: #{tpu_custom_call.1} parent=1 // pred_check
      _
    $region3: #{tpu_custom_call.1} parent=1 // pred_check_branch
      %9 = sbr.rel (0) target = $region5
    $region4: #{tpu_custom_call.1} parent=1 // pred_region
      %s11 = ssub.s32 256, 256
      %12 = vsyncadd [#allocation3], %s11
      %s14 = sshll.u32 [#allocation2], 4
      %s15 = int_to_ptr.vmem [resolvable:$true] %s14
      %17 = dma.hbm_to_vmem [thread:$0]  %s0, 256, %s15, [#allocation3]
    $region5: #{tpu_custom_call.1} parent=1 // pred_fallthru
      _
    // Predicated region
    $region6: #{tpu_custom_call.1} parent=1 // pred_check
      _
    $region7: #{tpu_custom_call.1} parent=1 // pred_check_branch
      %19 = sbr.rel (0) target = $region9
    $region8: #{tpu_custom_call.1} parent=1 // pred_region
      %20 = dma.done [#allocation3], 256
    $region9: #{tpu_custom_call.1} parent=1 // pred_fallthru
      _
    %v21 = vld [vmem:[#allocation2] sm:$0xff]
    %v22 = vld [vmem:[#allocation2 + $0x8] sm:$0xff]
    %v23 = vxor.u32 %v21, 2147483648
    %v24 = vxor.u32 %v22, 2147483648
    %v25 = vmul.f32 %v23, 1.442695
    %v26 = vpow.pop %v25
    %v27 = vmul.f32 %v24, 1.442695
    %v28 = vpow.pop %v27
    %v29 = vadd.f32 %v26, 1.0
    %v30 = vadd.f32 %v28, 1.0
    %v31 = vrcp.pop %v29
    %v32 = vmul.f32 1.0, %v31
    %v33 = vrcp.pop %v30
    %v34 = vmul.f32 1.0, %v33
    %v35 = vmul.f32 %v21, %v32
    %v36 = vmul.f32 %v22, %v34
    %37 = vst [vmem:[#allocation5] sm:$0xff] %v35
    %38 = vst [vmem:[#allocation5 + $0x8] sm:$0xff] %v36
    // Predicated region
    $region10: #{tpu_custom_call.1} parent=1 // pred_check
      _
    $region11: #{tpu_custom_call.1} parent=1 // pred_check_branch
      %40 = sbr.rel (0) target = $region13
    $region12: #{tpu_custom_call.1} parent=1 // pred_region
      %s42 = ssub.s32 256, 256
      %43 = vsyncadd [#allocation4], %s42
      %s45 = sshll.u32 [#allocation5], 4
      %s46 = int_to_ptr.vmem [resolvable:$true] %s45
      %48 = dma.vmem_to_hbm [thread:$0]  %s46, 256, %s1, [#allocation4]
    $region13: #{tpu_custom_call.1} parent=1 // pred_fallthru
      _
    // Predicated region
    $region14: #{tpu_custom_call.1} parent=1 // pred_check
      _
    $region15: #{tpu_custom_call.1} parent=1 // pred_check_branch
      %50 = sbr.rel (0) target = $region17
    $region16: #{tpu_custom_call.1} parent=1 // pred_region
      %51 = dma.done [#allocation4], 256
    $region17: #{tpu_custom_call.1} parent=1 // pred_fallthru
      _
    %52 = vsyncpa [#allocation3], 1
    %53 = vsyncpa [#allocation4], 1

</llo_original>
